<compile_context>
chip_gen: v7x
topology: tpu7x:2x2x1
jax: 0.10.0
libtpu: 0.0.40
codegen_flags: <defaults>
</compile_context>

<pallas_src>
import jax
import jax.numpy as jnp
from jax.experimental import pallas as pl
from jax.experimental.pallas import tpu as pltpu

LEAKY_SLOPE = 0.01   # nn.LeakyReLU default negative_slope
BN_EPS = 1e-5        # nn.BatchNorm1d default eps


def _leaky_relu(x):
    return jnp.where(x > 0, x, LEAKY_SLOPE * x)


def _round_up(n, m):
    return ((n + m - 1) // m) * m


# ------------------------------- kernel -------------------------------

def vae_forward_kernel(
    x_ref, eps_ref,
    e1w, e1b,          # encoder layer 1: Linear(D,24) with BN folded in
    e2w, e2b,          # encoder layer 2: Linear(24,16) with BN folded in
    mvw, mvb,          # [fc_mu | fc_var] concatenated -> [16, 2L]
    d1w, d1b,          # decoder_input fused with decoder layer 1 (+ BN folded)
    d2w, d2b,          # decoder layer 2: Linear(16,24) with BN folded in
    fw, fb,            # final layer: Linear(24, D)
    recon_ref, mv_ref,
):
    x = x_ref[...]

    # ---------------- encoder (Dropout is identity at inference) ----------------
    h = _leaky_relu(jnp.dot(x, e1w[...], preferred_element_type=jnp.float32) + e1b[...])
    h = _leaky_relu(jnp.dot(h, e2w[...], preferred_element_type=jnp.float32) + e2b[...])

    # ---------------- latent heads: single fused matmul for [mu | logvar] -------
    mv = jnp.dot(h, mvw[...], preferred_element_type=jnp.float32) + mvb[...]
    L = eps_ref.shape[1]
    mu = mv[:, :L]
    logvar = mv[:, L:]

    # ---------------- reparameterize: z = eps * exp(0.5*logvar) + mu ------------
    z = eps_ref[...] * jnp.exp(0.5 * logvar) + mu

    # ---------------- decoder (decoder_input fused into d1) ---------------------
    d = _leaky_relu(jnp.dot(z, d1w[...], preferred_element_type=jnp.float32) + d1b[...])
    d = _leaky_relu(jnp.dot(d, d2w[...], preferred_element_type=jnp.float32) + d2b[...])

    recon_ref[...] = jnp.dot(d, fw[...], preferred_element_type=jnp.float32) + fb[...]
    mv_ref[...] = mv


# ------------------------------- wrapper -------------------------------

def vae_forward(x, eps, kernel_params, tile_b=256):
    """x: [B, ...] (flattened to [B, D]); eps: [B, L]; kernel_params: fold_params() output.

    Returns [recon, x_flat, mu, logvar] (same as the PyTorch forward)."""
    B = x.shape[0]
    x_flat = x.reshape(B, -1).astype(jnp.float32)
    D = x_flat.shape[1]
    L = eps.shape[1]
    eps = eps.astype(jnp.float32)

    # Row tile: multiple of 8 sublanes, capped at ~256 to keep the activation
    # chain in vregs (feature dims all fit in one 128-lane column).
    tile_b = min(tile_b, _round_up(B, 8))
    Bp = _round_up(B, tile_b)
    if Bp != B:
        pad = Bp - B
        x_pad = jnp.pad(x_flat, ((0, pad), (0, 0)))
        eps_pad = jnp.pad(eps, ((0, pad), (0, 0)))
    else:
        x_pad, eps_pad = x_flat, eps

    grid = (Bp // tile_b,)

    def row_spec(width):
        return pl.BlockSpec((tile_b, width), lambda i: (i, 0))

    def resident_spec(arr):
        # Full-array block with constant index_map: DMA'd once, stays in VMEM.
        return pl.BlockSpec(arr.shape, lambda i: (0,) * arr.ndim)

    in_specs = [row_spec(D), row_spec(L)] + [resident_spec(p) for p in kernel_params]

    out_shape = (
        jax.ShapeDtypeStruct((Bp, D), jnp.float32),       # reconstruction
        jax.ShapeDtypeStruct((Bp, 2 * L), jnp.float32),   # [mu | logvar]
    )
    out_specs = (row_spec(D), row_spec(2 * L))

    recon, mv = pl.pallas_call(
        vae_forward_kernel,
        out_shape=out_shape,
        grid=grid,
        in_specs=in_specs,
        out_specs=out_specs,
        compiler_params=pltpu.CompilerParams(dimension_semantics=("parallel",)),
    )(x_pad, eps_pad, *kernel_params)

    recon = recon[:B]
    mu = mv[:B, :L]
    logvar = mv[:B, L:]
    return recon, x_flat, mu, logvar


# --------------------- deterministic parameters + glue-side fusion ---------------------

def make_raw_params(key, input_dim, latent_dim, hidden_dims=(16, 24), window_size=1):
    """PyTorch-equivalent parameters: Linear weight stored as [in, out], bias [1, out];
    raw BatchNorm1d (gamma, beta, running_mean, running_var)."""
    D = input_dim * window_size
    h0, h1 = hidden_dims
    keys = jax.random.split(key, 12)

    def linear(k, fi, fo):
        kw, kb = jax.random.split(k)
        bound = 1.0 / jnp.sqrt(jnp.float32(fi))
        w = jax.random.uniform(kw, (fi, fo), jnp.float32, -bound, bound)
        b = jax.random.uniform(kb, (1, fo), jnp.float32, -bound, bound)
        return w, b

    def bn(k, n):
        kg, kb, km, kv = jax.random.split(k, 4)
        gamma = 1.0 + 0.1 * jax.random.normal(kg, (1, n), jnp.float32)
        beta = 0.1 * jax.random.normal(kb, (1, n), jnp.float32)
        mean = 0.1 * jax.random.normal(km, (1, n), jnp.float32)
        var = 1.0 + 0.1 * jax.random.uniform(kv, (1, n), jnp.float32)
        return gamma, beta, mean, var

    return dict(
        e1=linear(keys[0], D, h1), e1bn=bn(keys[1], h1),          # encoder: reversed(hidden_dims)
        e2=linear(keys[2], h1, h0), e2bn=bn(keys[3], h0),
        mu=linear(keys[4], h0, latent_dim),
        var=linear(keys[5], h0, latent_dim),
        di=linear(keys[6], latent_dim, h0),                        # decoder_input
        d1=linear(keys[7], h0, h0), d1bn=bn(keys[8], h0),          # decoder: hidden_dims order
        d2=linear(keys[9], h0, h1), d2bn=bn(keys[10], h1),
        fin=linear(keys[11], h1, D),
    )


def _fold_bn(w, b, bn):
    """Fold eval-mode BatchNorm1d into the preceding Linear: y = x @ W' + b'."""
    gamma, beta, mean, var = bn
    scale = gamma / jnp.sqrt(var + BN_EPS)   # [1, out]
    shift = beta - mean * scale
    return w * scale, b * scale + shift


def fold_params(raw):
    """Glue-side fusion producing the kernel's parameter list (order = kernel signature)."""
    e1w, e1b = _fold_bn(*raw["e1"], raw["e1bn"])
    e2w, e2b = _fold_bn(*raw["e2"], raw["e2bn"])

    # fc_mu | fc_var concatenated into one head
    muw, mub = raw["mu"]
    vaw, vab = raw["var"]
    mvw = jnp.concatenate([muw, vaw], axis=1)
    mvb = jnp.concatenate([mub, vab], axis=1)

    # decoder_input Linear fused with decoder layer-1 Linear (no nonlinearity between them)
    diw, dib = raw["di"]
    d1w_raw, d1b_raw = raw["d1"]
    d1w = diw @ d1w_raw
    d1b = dib @ d1w_raw + d1b_raw
    d1w, d1b = _fold_bn(d1w, d1b, raw["d1bn"])

    d2w, d2b = _fold_bn(*raw["d2"], raw["d2bn"])

    fw, fb = raw["fin"]

    return [e1w, e1b, e2w, e2b, mvw, mvb, d1w, d1b, d2w, d2b, fw, fb]


# --------------------------- pure-JAX reference (unfused) ---------------------------

def reference_forward(x, eps, raw):
    B = x.shape[0]
    x_flat = x.reshape(B, -1).astype(jnp.float32)

    def bn_eval(h, bn):
        gamma, beta, mean, var = bn
        return (h - mean) / jnp.sqrt(var + BN_EPS) * gamma + beta

    def block(h, lin, bn):
        w, b = lin
        h = bn_eval(h @ w + b, bn)
        return jnp.where(h > 0, h, LEAKY_SLOPE * h)

    h = block(x_flat, raw["e1"], raw["e1bn"])
    h = block(h, raw["e2"], raw["e2bn"])
    mu = h @ raw["mu"][0] + raw["mu"][1]
    logvar = h @ raw["var"][0] + raw["var"][1]
    z = eps * jnp.exp(0.5 * logvar) + mu
    d = z @ raw["di"][0] + raw["di"][1]
    d = block(d, raw["d1"], raw["d1bn"])
    d = block(d, raw["d2"], raw["d2bn"])
    recon = d @ raw["fin"][0] + raw["fin"][1]
    return recon, x_flat, mu, logvar


if __name__ == "__main__":
    # Small, module-consistent shapes: input is [N x D] (window_size=1).
    batch = 8
    input_dim = 32
    latent_dim = 8

    key = jax.random.PRNGKey(0)
    k_x, k_eps, k_p = jax.random.split(key, 3)

    x = jax.random.normal(k_x, (batch, input_dim), jnp.float32)
    # eps for the reparameterization trick (torch.randn_like), generated in glue.
    eps = jax.random.normal(k_eps, (batch, latent_dim), jnp.float32)

    raw = make_raw_params(k_p, input_dim, latent_dim)
    params = fold_params(raw)

    recon, x_flat, mu, logvar = vae_forward(x, eps, params)
    jax.block_until_ready((recon, x_flat, mu, logvar))

    assert recon.shape == (batch, input_dim)
    assert x_flat.shape == (batch, input_dim)
    assert mu.shape == (batch, latent_dim)
    assert logvar.shape == (batch, latent_dim)

    # Verify against the unfused pure-JAX reference (PyTorch eval semantics).
    r_recon, r_x, r_mu, r_lv = reference_forward(x, eps, raw)
    assert jnp.allclose(x_flat, r_x)
    assert jnp.allclose(mu, r_mu, atol=1e-5, rtol=1e-5)
    assert jnp.allclose(logvar, r_lv, atol=1e-5, rtol=1e-5)
    assert jnp.allclose(recon, r_recon, atol=1e-4, rtol=1e-4)

    print("KERNEL_OK")
</pallas_src>

<mosaic_0001>
module attributes {stable_mosaic.version = 11 : i64} {
  func.func @vae_forward_kernel(%arg0: i32, %arg1: memref<8x32xf32, #tpu.memory_space<vmem>>, %arg2: memref<8x8xf32, #tpu.memory_space<vmem>>, %arg3: memref<32x24xf32, #tpu.memory_space<vmem>>, %arg4: memref<1x24xf32, #tpu.memory_space<vmem>>, %arg5: memref<24x16xf32, #tpu.memory_space<vmem>>, %arg6: memref<1x16xf32, #tpu.memory_space<vmem>>, %arg7: memref<16x16xf32, #tpu.memory_space<vmem>>, %arg8: memref<1x16xf32, #tpu.memory_space<vmem>>, %arg9: memref<8x16xf32, #tpu.memory_space<vmem>>, %arg10: memref<1x16xf32, #tpu.memory_space<vmem>>, %arg11: memref<16x24xf32, #tpu.memory_space<vmem>>, %arg12: memref<1x24xf32, #tpu.memory_space<vmem>>, %arg13: memref<24x32xf32, #tpu.memory_space<vmem>>, %arg14: memref<1x32xf32, #tpu.memory_space<vmem>>, %arg15: memref<8x32xf32, #tpu.memory_space<vmem>>, %arg16: memref<8x16xf32, #tpu.memory_space<vmem>>) attributes {dimension_semantics = [#tpu.dimension_semantics<parallel>], iteration_bounds = array<i64: 1>, scalar_prefetch = 0 : i64, scratch_operands = 0 : i64, tpu.core_type = #tpu.core_type<tc>, window_params = [{transform_indices = @transform_0, window_bounds = array<i64: 8, 32>}, {transform_indices = @transform_1, window_bounds = array<i64: 8, 8>}, {pipeline_mode = #tpu.pipeline_mode<synchronous>, transform_indices = @transform_2, window_bounds = array<i64: 32, 24>}, {pipeline_mode = #tpu.pipeline_mode<synchronous>, transform_indices = @transform_3, window_bounds = array<i64: 1, 24>}, {pipeline_mode = #tpu.pipeline_mode<synchronous>, transform_indices = @transform_4, window_bounds = array<i64: 24, 16>}, {pipeline_mode = #tpu.pipeline_mode<synchronous>, transform_indices = @transform_5, window_bounds = array<i64: 1, 16>}, {pipeline_mode = #tpu.pipeline_mode<synchronous>, transform_indices = @transform_6, window_bounds = array<i64: 16, 16>}, {pipeline_mode = #tpu.pipeline_mode<synchronous>, transform_indices = @transform_7, window_bounds = array<i64: 1, 16>}, {pipeline_mode = #tpu.pipeline_mode<synchronous>, transform_indices = @transform_8, window_bounds = array<i64: 8, 16>}, {pipeline_mode = #tpu.pipeline_mode<synchronous>, transform_indices = @transform_9, window_bounds = array<i64: 1, 16>}, {pipeline_mode = #tpu.pipeline_mode<synchronous>, transform_indices = @transform_10, window_bounds = array<i64: 16, 24>}, {pipeline_mode = #tpu.pipeline_mode<synchronous>, transform_indices = @transform_11, window_bounds = array<i64: 1, 24>}, {pipeline_mode = #tpu.pipeline_mode<synchronous>, transform_indices = @transform_12, window_bounds = array<i64: 24, 32>}, {pipeline_mode = #tpu.pipeline_mode<synchronous>, transform_indices = @transform_13, window_bounds = array<i64: 1, 32>}, {transform_indices = @transform_14, window_bounds = array<i64: 8, 32>}, {transform_indices = @transform_15, window_bounds = array<i64: 8, 16>}]} {
    %c0 = arith.constant 0 : index
    %c0_0 = arith.constant 0 : index
    %0 = vector.load %arg1[%c0, %c0_0] : memref<8x32xf32, #tpu.memory_space<vmem>>, vector<8x32xf32>
    %c0_1 = arith.constant 0 : index
    %c0_2 = arith.constant 0 : index
    %1 = vector.load %arg3[%c0_1, %c0_2] : memref<32x24xf32, #tpu.memory_space<vmem>>, vector<32x24xf32>
    %cst = arith.constant dense<0.000000e+00> : vector<8x24xf32>
    %2 = tpu.matmul %0, %1, %cst {dimension_numbers = #tpu.dot_dimension_numbers<[1], [0], [0], [1], [0, 0, 1, 1], [], []>} : vector<8x32xf32>, vector<32x24xf32>, vector<8x24xf32> -> vector<8x24xf32>
    %c0_3 = arith.constant 0 : index
    %c0_4 = arith.constant 0 : index
    %3 = vector.load %arg4[%c0_3, %c0_4] : memref<1x24xf32, #tpu.memory_space<vmem>>, vector<1x24xf32>
    %4 = vector.broadcast %3 : vector<1x24xf32> to vector<8x24xf32>
    %5 = arith.addf %2, %4 : vector<8x24xf32>
    %cst_5 = arith.constant 0.000000e+00 : f32
    %6 = vector.broadcast %cst_5 : f32 to vector<8x24xf32>
    %7 = arith.cmpf ogt, %5, %6 : vector<8x24xf32>
    %cst_6 = arith.constant 0.00999999977 : f32
    %8 = vector.broadcast %cst_6 : f32 to vector<8x24xf32>
    %9 = arith.mulf %8, %5 : vector<8x24xf32>
    %10 = arith.select %7, %5, %9 : vector<8x24xi1>, vector<8x24xf32>
    %c0_7 = arith.constant 0 : index
    %c0_8 = arith.constant 0 : index
    %11 = vector.load %arg5[%c0_7, %c0_8] : memref<24x16xf32, #tpu.memory_space<vmem>>, vector<24x16xf32>
    %cst_9 = arith.constant dense<0.000000e+00> : vector<8x16xf32>
    %12 = tpu.matmul %10, %11, %cst_9 {dimension_numbers = #tpu.dot_dimension_numbers<[1], [0], [0], [1], [0, 0, 1, 1], [], []>} : vector<8x24xf32>, vector<24x16xf32>, vector<8x16xf32> -> vector<8x16xf32>
    %c0_10 = arith.constant 0 : index
    %c0_11 = arith.constant 0 : index
    %13 = vector.load %arg6[%c0_10, %c0_11] : memref<1x16xf32, #tpu.memory_space<vmem>>, vector<1x16xf32>
    %14 = vector.broadcast %13 : vector<1x16xf32> to vector<8x16xf32>
    %15 = arith.addf %12, %14 : vector<8x16xf32>
    %cst_12 = arith.constant 0.000000e+00 : f32
    %16 = vector.broadcast %cst_12 : f32 to vector<8x16xf32>
    %17 = arith.cmpf ogt, %15, %16 : vector<8x16xf32>
    %cst_13 = arith.constant 0.00999999977 : f32
    %18 = vector.broadcast %cst_13 : f32 to vector<8x16xf32>
    %19 = arith.mulf %18, %15 : vector<8x16xf32>
    %20 = arith.select %17, %15, %19 : vector<8x16xi1>, vector<8x16xf32>
    %c0_14 = arith.constant 0 : index
    %c0_15 = arith.constant 0 : index
    %21 = vector.load %arg7[%c0_14, %c0_15] : memref<16x16xf32, #tpu.memory_space<vmem>>, vector<16x16xf32>
    %cst_16 = arith.constant dense<0.000000e+00> : vector<8x16xf32>
    %22 = tpu.matmul %20, %21, %cst_16 {dimension_numbers = #tpu.dot_dimension_numbers<[1], [0], [0], [1], [0, 0, 1, 1], [], []>} : vector<8x16xf32>, vector<16x16xf32>, vector<8x16xf32> -> vector<8x16xf32>
    %c0_17 = arith.constant 0 : index
    %c0_18 = arith.constant 0 : index
    %23 = vector.load %arg8[%c0_17, %c0_18] : memref<1x16xf32, #tpu.memory_space<vmem>>, vector<1x16xf32>
    %24 = vector.broadcast %23 : vector<1x16xf32> to vector<8x16xf32>
    %25 = arith.addf %22, %24 : vector<8x16xf32>
    %26 = vector.extract_strided_slice %25 {offsets = [0, 0], sizes = [8, 8], strides = [1, 1]} : vector<8x16xf32> to vector<8x8xf32>
    %27 = vector.extract_strided_slice %25 {offsets = [0, 8], sizes = [8, 8], strides = [1, 1]} : vector<8x16xf32> to vector<8x8xf32>
    %c0_19 = arith.constant 0 : index
    %c0_20 = arith.constant 0 : index
    %28 = vector.load %arg2[%c0_19, %c0_20] : memref<8x8xf32, #tpu.memory_space<vmem>>, vector<8x8xf32>
    %cst_21 = arith.constant 5.000000e-01 : f32
    %29 = vector.broadcast %cst_21 : f32 to vector<8x8xf32>
    %30 = arith.mulf %29, %27 : vector<8x8xf32>
    %31 = math.exp %30 : vector<8x8xf32>
    %32 = arith.mulf %28, %31 : vector<8x8xf32>
    %33 = arith.addf %32, %26 : vector<8x8xf32>
    %c0_22 = arith.constant 0 : index
    %c0_23 = arith.constant 0 : index
    %34 = vector.load %arg9[%c0_22, %c0_23] : memref<8x16xf32, #tpu.memory_space<vmem>>, vector<8x16xf32>
    %cst_24 = arith.constant dense<0.000000e+00> : vector<8x16xf32>
    %35 = tpu.matmul %33, %34, %cst_24 {dimension_numbers = #tpu.dot_dimension_numbers<[1], [0], [0], [1], [0, 0, 1, 1], [], []>} : vector<8x8xf32>, vector<8x16xf32>, vector<8x16xf32> -> vector<8x16xf32>
    %c0_25 = arith.constant 0 : index
    %c0_26 = arith.constant 0 : index
    %36 = vector.load %arg10[%c0_25, %c0_26] : memref<1x16xf32, #tpu.memory_space<vmem>>, vector<1x16xf32>
    %37 = vector.broadcast %36 : vector<1x16xf32> to vector<8x16xf32>
    %38 = arith.addf %35, %37 : vector<8x16xf32>
    %cst_27 = arith.constant 0.000000e+00 : f32
    %39 = vector.broadcast %cst_27 : f32 to vector<8x16xf32>
    %40 = arith.cmpf ogt, %38, %39 : vector<8x16xf32>
    %cst_28 = arith.constant 0.00999999977 : f32
    %41 = vector.broadcast %cst_28 : f32 to vector<8x16xf32>
    %42 = arith.mulf %41, %38 : vector<8x16xf32>
    %43 = arith.select %40, %38, %42 : vector<8x16xi1>, vector<8x16xf32>
    %c0_29 = arith.constant 0 : index
    %c0_30 = arith.constant 0 : index
    %44 = vector.load %arg11[%c0_29, %c0_30] : memref<16x24xf32, #tpu.memory_space<vmem>>, vector<16x24xf32>
    %cst_31 = arith.constant dense<0.000000e+00> : vector<8x24xf32>
    %45 = tpu.matmul %43, %44, %cst_31 {dimension_numbers = #tpu.dot_dimension_numbers<[1], [0], [0], [1], [0, 0, 1, 1], [], []>} : vector<8x16xf32>, vector<16x24xf32>, vector<8x24xf32> -> vector<8x24xf32>
    %c0_32 = arith.constant 0 : index
    %c0_33 = arith.constant 0 : index
    %46 = vector.load %arg12[%c0_32, %c0_33] : memref<1x24xf32, #tpu.memory_space<vmem>>, vector<1x24xf32>
    %47 = vector.broadcast %46 : vector<1x24xf32> to vector<8x24xf32>
    %48 = arith.addf %45, %47 : vector<8x24xf32>
    %cst_34 = arith.constant 0.000000e+00 : f32
    %49 = vector.broadcast %cst_34 : f32 to vector<8x24xf32>
    %50 = arith.cmpf ogt, %48, %49 : vector<8x24xf32>
    %cst_35 = arith.constant 0.00999999977 : f32
    %51 = vector.broadcast %cst_35 : f32 to vector<8x24xf32>
    %52 = arith.mulf %51, %48 : vector<8x24xf32>
    %53 = arith.select %50, %48, %52 : vector<8x24xi1>, vector<8x24xf32>
    %c0_36 = arith.constant 0 : index
    %c0_37 = arith.constant 0 : index
    %54 = vector.load %arg13[%c0_36, %c0_37] : memref<24x32xf32, #tpu.memory_space<vmem>>, vector<24x32xf32>
    %cst_38 = arith.constant dense<0.000000e+00> : vector<8x32xf32>
    %55 = tpu.matmul %53, %54, %cst_38 {dimension_numbers = #tpu.dot_dimension_numbers<[1], [0], [0], [1], [0, 0, 1, 1], [], []>} : vector<8x24xf32>, vector<24x32xf32>, vector<8x32xf32> -> vector<8x32xf32>
    %c0_39 = arith.constant 0 : index
    %c0_40 = arith.constant 0 : index
    %56 = vector.load %arg14[%c0_39, %c0_40] : memref<1x32xf32, #tpu.memory_space<vmem>>, vector<1x32xf32>
    %57 = vector.broadcast %56 : vector<1x32xf32> to vector<8x32xf32>
    %58 = arith.addf %55, %57 : vector<8x32xf32>
    %c0_41 = arith.constant 0 : index
    %c0_42 = arith.constant 0 : index
    %59 = vector.load %arg15[%c0_41, %c0_42] : memref<8x32xf32, #tpu.memory_space<vmem>>, vector<8x32xf32>
    tpu.vector_store %arg15[%c0_41, %c0_42], %58 {strides = array<i32>} : memref<8x32xf32, #tpu.memory_space<vmem>>, vector<8x32xf32>,
    %c0_43 = arith.constant 0 : index
    %c0_44 = arith.constant 0 : index
    %60 = vector.load %arg16[%c0_43, %c0_44] : memref<8x16xf32, #tpu.memory_space<vmem>>, vector<8x16xf32>
    tpu.vector_store %arg16[%c0_43, %c0_44], %25 {strides = array<i32>} : memref<8x16xf32, #tpu.memory_space<vmem>>, vector<8x16xf32>,
    return
  }
  func.func @transform_0(%arg0: i32) -> (i32, i32) {
    %c0_i32 = arith.constant 0 : i32
    %c0_i32_0 = arith.constant 0 : i32
    return %arg0, %c0_i32 : i32, i32
  }
  func.func @transform_1(%arg0: i32) -> (i32, i32) {
    %c0_i32 = arith.constant 0 : i32
    %c0_i32_0 = arith.constant 0 : i32
    return %arg0, %c0_i32 : i32, i32
  }
  func.func @transform_2(%arg0: i32) -> (i32, i32) {
    %c0_i32 = arith.constant 0 : i32
    %c0_i32_0 = arith.constant 0 : i32
    %c0_i32_1 = arith.constant 0 : i32
    return %c0_i32, %c0_i32_0 : i32, i32
  }
  func.func @transform_3(%arg0: i32) -> (i32, i32) {
    %c0_i32 = arith.constant 0 : i32
    %c0_i32_0 = arith.constant 0 : i32
    %c0_i32_1 = arith.constant 0 : i32
    return %c0_i32, %c0_i32_0 : i32, i32
  }
  func.func @transform_4(%arg0: i32) -> (i32, i32) {
    %c0_i32 = arith.constant 0 : i32
    %c0_i32_0 = arith.constant 0 : i32
    %c0_i32_1 = arith.constant 0 : i32
    return %c0_i32, %c0_i32_0 : i32, i32
  }
  func.func @transform_5(%arg0: i32) -> (i32, i32) {
    %c0_i32 = arith.constant 0 : i32
    %c0_i32_0 = arith.constant 0 : i32
    %c0_i32_1 = arith.constant 0 : i32
    return %c0_i32, %c0_i32_0 : i32, i32
  }
  func.func @transform_6(%arg0: i32) -> (i32, i32) {
    %c0_i32 = arith.constant 0 : i32
    %c0_i32_0 = arith.constant 0 : i32
    %c0_i32_1 = arith.constant 0 : i32
    return %c0_i32, %c0_i32_0 : i32, i32
  }
  func.func @transform_7(%arg0: i32) -> (i32, i32) {
    %c0_i32 = arith.constant 0 : i32
    %c0_i32_0 = arith.constant 0 : i32
    %c0_i32_1 = arith.constant 0 : i32
    return %c0_i32, %c0_i32_0 : i32, i32
  }
  func.func @transform_8(%arg0: i32) -> (i32, i32) {
    %c0_i32 = arith.constant 0 : i32
    %c0_i32_0 = arith.constant 0 : i32
    %c0_i32_1 = arith.constant 0 : i32
    return %c0_i32, %c0_i32_0 : i32, i32
  }
  func.func @transform_9(%arg0: i32) -> (i32, i32) {
    %c0_i32 = arith.constant 0 : i32
    %c0_i32_0 = arith.constant 0 : i32
    %c0_i32_1 = arith.constant 0 : i32
    return %c0_i32, %c0_i32_0 : i32, i32
  }
  func.func @transform_10(%arg0: i32) -> (i32, i32) {
    %c0_i32 = arith.constant 0 : i32
    %c0_i32_0 = arith.constant 0 : i32
    %c0_i32_1 = arith.constant 0 : i32
    return %c0_i32, %c0_i32_0 : i32, i32
  }
  func.func @transform_11(%arg0: i32) -> (i32, i32) {
    %c0_i32 = arith.constant 0 : i32
    %c0_i32_0 = arith.constant 0 : i32
    %c0_i32_1 = arith.constant 0 : i32
    return %c0_i32, %c0_i32_0 : i32, i32
  }
  func.func @transform_12(%arg0: i32) -> (i32, i32) {
    %c0_i32 = arith.constant 0 : i32
    %c0_i32_0 = arith.constant 0 : i32
    %c0_i32_1 = arith.constant 0 : i32
    return %c0_i32, %c0_i32_0 : i32, i32
  }
  func.func @transform_13(%arg0: i32) -> (i32, i32) {
    %c0_i32 = arith.constant 0 : i32
    %c0_i32_0 = arith.constant 0 : i32
    %c0_i32_1 = arith.constant 0 : i32
    return %c0_i32, %c0_i32_0 : i32, i32
  }
  func.func @transform_14(%arg0: i32) -> (i32, i32) {
    %c0_i32 = arith.constant 0 : i32
    %c0_i32_0 = arith.constant 0 : i32
    return %arg0, %c0_i32 : i32, i32
  }
  func.func @transform_15(%arg0: i32) -> (i32, i32) {
    %c0_i32 = arith.constant 0 : i32
    %c0_i32_0 = arith.constant 0 : i32
    return %arg0, %c0_i32 : i32, i32
  }
}

</mosaic_0001>

<llo_original>
// kernel: tpu_custom_call.1
$region0: #{tpu_custom_call.1}
  #allocation0 [shape = 'u32[]', space=smem, size = 0x4, offset = 0x4, fixed_abs, tag = 'smem constant byte address 0x4 - core index']
  #allocation1 [shape = 'u32[144,128]{1,0:T(1,128)}', space=vmem, size = 0x12000, scoped, tag = 'internal scratch']
  %s0 = inlined_call_operand.vmem [shape: f32[8,32], index: 0, kind: input, shape index: {}]
  %s1 = inlined_call_operand.vmem [shape: f32[8,8], index: 1, kind: input, shape index: {}]
  %s2 = inlined_call_operand.vmem [shape: f32[32,24], index: 2, kind: input, shape index: {}]
  %s3 = inlined_call_operand.vmem [shape: f32[1,24], index: 3, kind: input, shape index: {}]
  %s4 = inlined_call_operand.vmem [shape: f32[24,16], index: 4, kind: input, shape index: {}]
  %s5 = inlined_call_operand.vmem [shape: f32[1,16], index: 5, kind: input, shape index: {}]
  %s6 = inlined_call_operand.vmem [shape: f32[16,16], index: 6, kind: input, shape index: {}]
  %s7 = inlined_call_operand.vmem [shape: f32[1,16], index: 7, kind: input, shape index: {}]
  %s8 = inlined_call_operand.vmem [shape: f32[8,16], index: 8, kind: input, shape index: {}]
  %s9 = inlined_call_operand.vmem [shape: f32[1,16], index: 9, kind: input, shape index: {}]
  %s10 = inlined_call_operand.vmem [shape: f32[16,24], index: 10, kind: input, shape index: {}]
  %s11 = inlined_call_operand.vmem [shape: f32[1,24], index: 11, kind: input, shape index: {}]
  %s12 = inlined_call_operand.vmem [shape: f32[24,32], index: 12, kind: input, shape index: {}]
  %s13 = inlined_call_operand.vmem [shape: f32[1,32], index: 13, kind: input, shape index: {}]
  %s14 = inlined_call_operand.hbm [shape: f32[8,32], index: 14, kind: output, shape index: {0}]
  %s15 = inlined_call_operand.hbm [shape: f32[8,16], index: 15, kind: output, shape index: {1}]
  %16 = xla_tuple %s14, %s15
  %s17 = sld [smem:[#allocation0]]
  $region74: #{tpu_custom_call.1} parent=0
    _
  %s19 = ssub.s32 1, %s17
  %s20 = scalar_select 0, %s19, %s17
  $region1: #{tpu_custom_call.1} parent=0
    #allocation2 [shape = 'u8[4096]{0}', space=vmem, size = 0x1000, scoped, tag = 'output window, operand 0, single buffered']
    #allocation3 [shape = 's32[1]{0}', space=sflag, size = 0x4, scoped, tag = 'scoped memory for tpu_custom_call.1']
    #allocation4 [shape = 'u8[4096]{0}', space=vmem, size = 0x1000, scoped, tag = 'output window, operand 1, single buffered']
    #allocation5 [shape = 's32[1]{0}', space=sflag, size = 0x4, scoped, tag = 'scoped memory for tpu_custom_call.1']
    %21 = vsyncpa [#allocation3], 0
    %22 = vsyncpa [#allocation5], 0
    // Predicated region
    $region2: #{tpu_custom_call.1} parent=1 // pred_check
      _
    $region3: #{tpu_custom_call.1} parent=1 // pred_check_branch
      %24 = sbr.rel (0) target = $region5
    $region4: #{tpu_custom_call.1} parent=1 // pred_region
      _
    $region5: #{tpu_custom_call.1} parent=1 // pred_fallthru
      _
    // Predicated region
    $region6: #{tpu_custom_call.1} parent=1 // pred_check
      _
    $region7: #{tpu_custom_call.1} parent=1 // pred_check_branch
      %26 = sbr.rel (0) target = $region9
    $region8: #{tpu_custom_call.1} parent=1 // pred_region
      _
    $region9: #{tpu_custom_call.1} parent=1 // pred_fallthru
      _
    // Predicated region
    $region10: #{tpu_custom_call.1} parent=1 // pred_check
      _
    $region11: #{tpu_custom_call.1} parent=1 // pred_check_branch
      %28 = sbr.rel (0) target = $region13
    $region12: #{tpu_custom_call.1} parent=1 // pred_region
      _
    $region13: #{tpu_custom_call.1} parent=1 // pred_fallthru
      _
    // Predicated region
    $region14: #{tpu_custom_call.1} parent=1 // pred_check
      _
    $region15: #{tpu_custom_call.1} parent=1 // pred_check_branch
      %30 = sbr.rel (0) target = $region17
    $region16: #{tpu_custom_call.1} parent=1 // pred_region
      _
    $region17: #{tpu_custom_call.1} parent=1 // pred_fallthru
      _
    // Predicated region
    $region18: #{tpu_custom_call.1} parent=1 // pred_check
      _
    $region19: #{tpu_custom_call.1} parent=1 // pred_check_branch
      %32 = sbr.rel (0) target = $region21
    $region20: #{tpu_custom_call.1} parent=1 // pred_region
      _
    $region21: #{tpu_custom_call.1} parent=1 // pred_fallthru
      _
    // Predicated region
    $region22: #{tpu_custom_call.1} parent=1 // pred_check
      _
    $region23: #{tpu_custom_call.1} parent=1 // pred_check_branch
      %34 = sbr.rel (0) target = $region25
    $region24: #{tpu_custom_call.1} parent=1 // pred_region
      _
    $region25: #{tpu_custom_call.1} parent=1 // pred_fallthru
      _
    // Predicated region
    $region26: #{tpu_custom_call.1} parent=1 // pred_check
      _
    $region27: #{tpu_custom_call.1} parent=1 // pred_check_branch
      %36 = sbr.rel (0) target = $region29
    $region28: #{tpu_custom_call.1} parent=1 // pred_region
      _
    $region29: #{tpu_custom_call.1} parent=1 // pred_fallthru
      _
    // Predicated region
    $region30: #{tpu_custom_call.1} parent=1 // pred_check
      _
    $region31: #{tpu_custom_call.1} parent=1 // pred_check_branch
      %38 = sbr.rel (0) target = $region33
    $region32: #{tpu_custom_call.1} parent=1 // pred_region
      _
    $region33: #{tpu_custom_call.1} parent=1 // pred_fallthru
      _
    // Predicated region
    $region34: #{tpu_custom_call.1} parent=1 // pred_check
      _
    $region35: #{tpu_custom_call.1} parent=1 // pred_check_branch
      %40 = sbr.rel (0) target = $region37
    $region36: #{tpu_custom_call.1} parent=1 // pred_region
      _
    $region37: #{tpu_custom_call.1} parent=1 // pred_fallthru
      _
    // Predicated region
    $region38: #{tpu_custom_call.1} parent=1 // pred_check
      _
    $region39: #{tpu_custom_call.1} parent=1 // pred_check_branch
      %42 = sbr.rel (0) target = $region41
    $region40: #{tpu_custom_call.1} parent=1 // pred_region
      _
    $region41: #{tpu_custom_call.1} parent=1 // pred_fallthru
      _
    // Predicated region
    $region42: #{tpu_custom_call.1} parent=1 // pred_check
      _
    $region43: #{tpu_custom_call.1} parent=1 // pred_check_branch
      %44 = sbr.rel (0) target = $region45
    $region44: #{tpu_custom_call.1} parent=1 // pred_region
      _
    $region45: #{tpu_custom_call.1} parent=1 // pred_fallthru
      _
    // Predicated region
    $region46: #{tpu_custom_call.1} parent=1 // pred_check
      _
    $region47: #{tpu_custom_call.1} parent=1 // pred_check_branch
      %46 = sbr.rel (0) target = $region49
    $region48: #{tpu_custom_call.1} parent=1 // pred_region
      _
    $region49: #{tpu_custom_call.1} parent=1 // pred_fallthru
      _
    // Predicated region
    $region50: #{tpu_custom_call.1} parent=1 // pred_check
      _
    $region51: #{tpu_custom_call.1} parent=1 // pred_check_branch
      %48 = sbr.rel (0) target = $region53
    $region52: #{tpu_custom_call.1} parent=1 // pred_region
      _
    $region53: #{tpu_custom_call.1} parent=1 // pred_fallthru
      _
    // Predicated region
    $region54: #{tpu_custom_call.1} parent=1 // pred_check
      _
    $region55: #{tpu_custom_call.1} parent=1 // pred_check_branch
      %50 = sbr.rel (0) target = $region57
    $region56: #{tpu_custom_call.1} parent=1 // pred_region
      _
    $region57: #{tpu_custom_call.1} parent=1 // pred_fallthru
      _
    %v51 = vld [vmem:[%s0] sm:$0xff]
    %v52 = vld [vmem:[%s2] sm:$0xff]
    %v53 = vld [vmem:[%s2 + $0x8] sm:$0xff]
    %v54 = vld [vmem:[%s2 + $0x10] sm:$0xff]
    %v55 = vld [vmem:[%s2 + $0x18] sm:$0xff]
    %v56 = vld [vmem:[%s3] sm:$0x1]
    %v58 = vlaneseq
    %v59 = vshrl.u32 %v58, 7
    %v60 = vsub.s32 0, %v59
    %v61 = vrot.slane %v56, %v60
    %vm63 = vcmask 261120
    %v65 = vsel %vm63, %v51, 0
    %67 = vmatprep.subr.mxu0 0.0
    %68 = vmatpush1.msra.mxu0 %v52
    %69 = vmatprep.subr.mxu0 0.0
    %70 = vmatpush1.msra.mxu0 %v53
    %71 = vmatprep.subr.mxu0 0.0
    %72 = vmatpush1.msra.mxu0 %v54
    %73 = vmatprep.subr.mxu0 0.0
    %74 = vmatpush1.msra.mxu0 %v55
    %75 = vmatprep.subr.mxu0 0.0
    %76 = vmatpush1.msra.mxu0 0.0
    %77 = vmatprep.subr.mxu0 0.0
    %78 = vmatpush1.msra.mxu0 0.0
    %79 = vmatprep.subr.mxu0 0.0
    %80 = vmatpush1.msra.mxu0 0.0
    %81 = vmatprep.subr.mxu0 0.0
    %82 = vmatpush1.msra.mxu0 0.0
    %83 = vmatprep.subr.mxu0 0.0
    %84 = vmatpush1.msra.mxu0 0.0
    %85 = vmatprep.subr.mxu0 0.0
    %86 = vmatpush1.msra.mxu0 0.0
    %87 = vmatprep.subr.mxu0 0.0
    %88 = vmatpush1.msra.mxu0 0.0
    %89 = vmatprep.subr.mxu0 0.0
    %90 = vmatpush1.msra.mxu0 0.0
    %91 = vmatprep.subr.mxu0 0.0
    %92 = vmatpush1.msra.mxu0 0.0
    %93 = vmatprep.subr.mxu0 0.0
    %94 = vmatpush1.msra.mxu0 0.0
    %95 = vmatprep.subr.mxu0 0.0
    %96 = vmatpush1.msra.mxu0 0.0
    %97 = vmatprep.subr.mxu0 0.0
    %98 = vmatpush1.msra.mxu0 0.0
    %99 = vmatprep.subr.mxu0 0.0
    %100 = vmatpush1.msra.mxu0 0.0
    %101 = vmatprep.subr.mxu0 0.0
    %102 = vmatpush1.msra.mxu0 0.0
    %103 = vmatprep.subr.mxu0 0.0
    %104 = vmatpush1.msra.mxu0 0.0
    %105 = vmatprep.subr.mxu0 0.0
    %106 = vmatpush1.msra.mxu0 0.0
    %107 = vmatprep.subr.mxu0 0.0
    %108 = vmatpush1.msra.mxu0 0.0
    %109 = vmatprep.subr.mxu0 0.0
    %110 = vmatpush1.msra.mxu0 0.0
    %111 = vmatprep.subr.mxu0 0.0
    %112 = vmatpush1.msra.mxu0 0.0
    %113 = vmatprep.subr.mxu0 0.0
    %114 = vmatpush1.msra.mxu0 0.0
    %115 = vmatprep.subr.mxu0 0.0
    %116 = vmatpush1.msra.mxu0 0.0
    %117 = vmatprep.subr.mxu0 0.0
    %118 = vmatpush1.msra.mxu0 0.0
    %119 = vmatprep.subr.mxu0 0.0
    %120 = vmatpush1.msra.mxu0 0.0
    %121 = vmatprep.subr.mxu0 0.0
    %122 = vmatpush1.msra.mxu0 0.0
    %123 = vmatprep.subr.mxu0 0.0
    %124 = vmatpush1.msra.mxu0 0.0
    %125 = vmatprep.subr.mxu0 0.0
    %126 = vmatpush1.msra.mxu0 0.0
    %127 = vmatprep.subr.mxu0 0.0
    %128 = vmatpush1.msra.mxu0 0.0
    %129 = vmatprep.subr.mxu0 0.0
    %130 = vmatpush1.msra.mxu0 0.0
    %131 = vmatprep.mubr.f32.mxu0 0.0
    %132 = vmatmul.mubr.f32.gmra.mrb[0].mxu0 %v65
    %v133 = vpop.f32.mrb[0].mxu0
    %v134 = vadd.f32 %v61, %v133
    %v135 = vpop.f32.mrb[0].mxu0
    %136 = vdwg.mxu0
    %vm137 = vcmp.gt.f32.partialorder %v134, 0.0
    %v138 = vmul.f32 %v134, 0.01
    %v139 = vsel %vm137, %v134, %v138
    %v140 = vld [vmem:[%s4] sm:$0xff]
    %v141 = vld [vmem:[%s4 + $0x8] sm:$0xff]
    %v142 = vld [vmem:[%s4 + $0x10] sm:$0xff]
    %v143 = vld [vmem:[%s5] sm:$0x1]
    %v145 = vlaneseq
    %v146 = vshrl.u32 %v145, 7
    %v147 = vsub.s32 0, %v146
    %v148 = vrot.slane %v143, %v147
    %vm150 = vcmask 195584
    %v152 = vsel %vm150, %v139, 0
    %154 = vmatprep.subr.mxu0 0.0
    %155 = vmatpush1.msra.mxu0 %v140
    %156 = vmatprep.subr.mxu0 0.0
    %157 = vmatpush1.msra.mxu0 %v141
    %158 = vmatprep.subr.mxu0 0.0
    %159 = vmatpush1.msra.mxu0 %v142
    %160 = vmatprep.subr.mxu0 0.0
    %161 = vmatpush1.msra.mxu0 0.0
    %162 = vmatprep.subr.mxu0 0.0
    %163 = vmatpush1.msra.mxu0 0.0
    %164 = vmatprep.subr.mxu0 0.0
    %165 = vmatpush1.msra.mxu0 0.0
    %166 = vmatprep.subr.mxu0 0.0
    %167 = vmatpush1.msra.mxu0 0.0
    %168 = vmatprep.subr.mxu0 0.0
    %169 = vmatpush1.msra.mxu0 0.0
    %170 = vmatprep.subr.mxu0 0.0
    %171 = vmatpush1.msra.mxu0 0.0
    %172 = vmatprep.subr.mxu0 0.0
    %173 = vmatpush1.msra.mxu0 0.0
    %174 = vmatprep.subr.mxu0 0.0
    %175 = vmatpush1.msra.mxu0 0.0
    %176 = vmatprep.subr.mxu0 0.0
    %177 = vmatpush1.msra.mxu0 0.0
    %178 = vmatprep.subr.mxu0 0.0
    %179 = vmatpush1.msra.mxu0 0.0
    %180 = vmatprep.subr.mxu0 0.0
    %181 = vmatpush1.msra.mxu0 0.0
    %182 = vmatprep.subr.mxu0 0.0
    %183 = vmatpush1.msra.mxu0 0.0
    %184 = vmatprep.subr.mxu0 0.0
    %185 = vmatpush1.msra.mxu0 0.0
    %186 = vmatprep.subr.mxu0 0.0
    %187 = vmatpush1.msra.mxu0 0.0
    %188 = vmatprep.subr.mxu0 0.0
    %189 = vmatpush1.msra.mxu0 0.0
    %190 = vmatprep.subr.mxu0 0.0
    %191 = vmatpush1.msra.mxu0 0.0
    %192 = vmatprep.subr.mxu0 0.0
    %193 = vmatpush1.msra.mxu0 0.0
    %194 = vmatprep.subr.mxu0 0.0
    %195 = vmatpush1.msra.mxu0 0.0
    %196 = vmatprep.subr.mxu0 0.0
    %197 = vmatpush1.msra.mxu0 0.0
    %198 = vmatprep.subr.mxu0 0.0
    %199 = vmatpush1.msra.mxu0 0.0
    %200 = vmatprep.subr.mxu0 0.0
    %201 = vmatpush1.msra.mxu0 0.0
    %202 = vmatprep.subr.mxu0 0.0
    %203 = vmatpush1.msra.mxu0 0.0
    %204 = vmatprep.subr.mxu0 0.0
    %205 = vmatpush1.msra.mxu0 0.0
    %206 = vmatprep.subr.mxu0 0.0
    %207 = vmatpush1.msra.mxu0 0.0
    %208 = vmatprep.subr.mxu0 0.0
    %209 = vmatpush1.msra.mxu0 0.0
    %210 = vmatprep.subr.mxu0 0.0
    %211 = vmatpush1.msra.mxu0 0.0
    %212 = vmatprep.subr.mxu0 0.0
    %213 = vmatpush1.msra.mxu0 0.0
    %214 = vmatprep.subr.mxu0 0.0
    %215 = vmatpush1.msra.mxu0 0.0
    %216 = vmatprep.subr.mxu0 0.0
    %217 = vmatpush1.msra.mxu0 0.0
    %218 = vmatprep.mubr.f32.mxu0 0.0
    %219 = vmatmul.mubr.f32.gmra.mrb[0].mxu0 %v152
    %v220 = vpop.f32.mrb[0].mxu0
    %v221 = vadd.f32 %v148, %v220
    %v222 = vpop.f32.mrb[0].mxu0
    %223 = vdwg.mxu0
    %vm224 = vcmp.gt.f32.partialorder %v221, 0.0
    %v225 = vmul.f32 %v221, 0.01
    %v226 = vsel %vm224, %v221, %v225
    %v227 = vld [vmem:[%s6] sm:$0xff]
    %v228 = vld [vmem:[%s6 + $0x8] sm:$0xff]
    %v229 = vld [vmem:[%s7] sm:$0x1]
    %v231 = vlaneseq
    %v232 = vshrl.u32 %v231, 7
    %v233 = vsub.s32 0, %v232
    %v234 = vrot.slane %v229, %v233
    %vm236 = vcmask 130048
    %v238 = vsel %vm236, %v226, 0
    %240 = vmatprep.subr.mxu0 0.0
    %241 = vmatpush1.msra.mxu0 %v227
    %242 = vmatprep.subr.mxu0 0.0
    %243 = vmatpush1.msra.mxu0 %v228
    %244 = vmatprep.subr.mxu0 0.0
    %245 = vmatpush1.msra.mxu0 0.0
    %246 = vmatprep.subr.mxu0 0.0
    %247 = vmatpush1.msra.mxu0 0.0
    %248 = vmatprep.subr.mxu0 0.0
    %249 = vmatpush1.msra.mxu0 0.0
    %250 = vmatprep.subr.mxu0 0.0
    %251 = vmatpush1.msra.mxu0 0.0
    %252 = vmatprep.subr.mxu0 0.0
    %253 = vmatpush1.msra.mxu0 0.0
    %254 = vmatprep.subr.mxu0 0.0
    %255 = vmatpush1.msra.mxu0 0.0
    %256 = vmatprep.subr.mxu0 0.0
    %257 = vmatpush1.msra.mxu0 0.0
    %258 = vmatprep.subr.mxu0 0.0
    %259 = vmatpush1.msra.mxu0 0.0
    %260 = vmatprep.subr.mxu0 0.0
    %261 = vmatpush1.msra.mxu0 0.0
    %262 = vmatprep.subr.mxu0 0.0
    %263 = vmatpush1.msra.mxu0 0.0
    %264 = vmatprep.subr.mxu0 0.0
    %265 = vmatpush1.msra.mxu0 0.0
    %266 = vmatprep.subr.mxu0 0.0
    %267 = vmatpush1.msra.mxu0 0.0
    %268 = vmatprep.subr.mxu0 0.0
    %269 = vmatpush1.msra.mxu0 0.0
    %270 = vmatprep.subr.mxu0 0.0
    %271 = vmatpush1.msra.mxu0 0.0
    %272 = vmatprep.subr.mxu0 0.0
    %273 = vmatpush1.msra.mxu0 0.0
    %274 = vmatprep.subr.mxu0 0.0
    %275 = vmatpush1.msra.mxu0 0.0
    %276 = vmatprep.subr.mxu0 0.0
    %277 = vmatpush1.msra.mxu0 0.0
    %278 = vmatprep.subr.mxu0 0.0
    %279 = vmatpush1.msra.mxu0 0.0
    %280 = vmatprep.subr.mxu0 0.0
    %281 = vmatpush1.msra.mxu0 0.0
    %282 = vmatprep.subr.mxu0 0.0
    %283 = vmatpush1.msra.mxu0 0.0
    %284 = vmatprep.subr.mxu0 0.0
    %285 = vmatpush1.msra.mxu0 0.0
    %286 = vmatprep.subr.mxu0 0.0
    %287 = vmatpush1.msra.mxu0 0.0
    %288 = vmatprep.subr.mxu0 0.0
    %289 = vmatpush1.msra.mxu0 0.0
    %290 = vmatprep.subr.mxu0 0.0
    %291 = vmatpush1.msra.mxu0 0.0
    %292 = vmatprep.subr.mxu0 0.0
    %293 = vmatpush1.msra.mxu0 0.0
    %294 = vmatprep.subr.mxu0 0.0
    %295 = vmatpush1.msra.mxu0 0.0
    %296 = vmatprep.subr.mxu0 0.0
    %297 = vmatpush1.msra.mxu0 0.0
    %298 = vmatprep.subr.mxu0 0.0
    %299 = vmatpush1.msra.mxu0 0.0
    %300 = vmatprep.subr.mxu0 0.0
    %301 = vmatpush1.msra.mxu0 0.0
    %302 = vmatprep.subr.mxu0 0.0
    %303 = vmatpush1.msra.mxu0 0.0
    %304 = vmatprep.mubr.f32.mxu0 0.0
    %305 = vmatmul.mubr.f32.gmra.mrb[0].mxu0 %v238
    %v306 = vpop.f32.mrb[0].mxu0
    %v307 = vadd.f32 %v234, %v306
    %v308 = vpop.f32.mrb[0].mxu0
    %309 = vdwg.mxu0
    %v310 = vld [vmem:[%s1] sm:$0xff]
    %v311 = vmul.f32 %v307, 0.5
    %v312 = vmul.f32 %v311, 1.442695
    %v313 = vpow.pop %v312
    %315 = vrot.lane.b32.xlu0 %v313, 120
    %v316 = vpop.permute.xlu0 %315
    %v318 = vmul.f32 %v310, %v316
    %v319 = vadd.f32 %v318, %v307
    %v320 = vld [vmem:[%s8] sm:$0xff]
    %v321 = vld [vmem:[%s9] sm:$0x1]
    %v323 = vlaneseq
    %v324 = vshrl.u32 %v323, 7
    %v325 = vsub.s32 0, %v324
    %v326 = vrot.slane %v321, %v325
    %vm328 = vcmask 64512
    %v330 = vsel %vm328, %v319, 0
    %332 = vmatprep.subr.mxu0 0.0
    %333 = vmatpush1.msra.mxu0 %v320
    %334 = vmatprep.subr.mxu0 0.0
    %335 = vmatpush1.msra.mxu0 0.0
    %336 = vmatprep.subr.mxu0 0.0
    %337 = vmatpush1.msra.mxu0 0.0
    %338 = vmatprep.subr.mxu0 0.0
    %339 = vmatpush1.msra.mxu0 0.0
    %340 = vmatprep.subr.mxu0 0.0
    %341 = vmatpush1.msra.mxu0 0.0
    %342 = vmatprep.subr.mxu0 0.0
    %343 = vmatpush1.msra.mxu0 0.0
    %344 = vmatprep.subr.mxu0 0.0
    %345 = vmatpush1.msra.mxu0 0.0
    %346 = vmatprep.subr.mxu0 0.0
    %347 = vmatpush1.msra.mxu0 0.0
    %348 = vmatprep.subr.mxu0 0.0
    %349 = vmatpush1.msra.mxu0 0.0
    %350 = vmatprep.subr.mxu0 0.0
    %351 = vmatpush1.msra.mxu0 0.0
    %352 = vmatprep.subr.mxu0 0.0
    %353 = vmatpush1.msra.mxu0 0.0
    %354 = vmatprep.subr.mxu0 0.0
    %355 = vmatpush1.msra.mxu0 0.0
    %356 = vmatprep.subr.mxu0 0.0
    %357 = vmatpush1.msra.mxu0 0.0
    %358 = vmatprep.subr.mxu0 0.0
    %359 = vmatpush1.msra.mxu0 0.0
    %360 = vmatprep.subr.mxu0 0.0
    %361 = vmatpush1.msra.mxu0 0.0
    %362 = vmatprep.subr.mxu0 0.0
    %363 = vmatpush1.msra.mxu0 0.0
    %364 = vmatprep.subr.mxu0 0.0
    %365 = vmatpush1.msra.mxu0 0.0
    %366 = vmatprep.subr.mxu0 0.0
    %367 = vmatpush1.msra.mxu0 0.0
    %368 = vmatprep.subr.mxu0 0.0
    %369 = vmatpush1.msra.mxu0 0.0
    %370 = vmatprep.subr.mxu0 0.0
    %371 = vmatpush1.msra.mxu0 0.0
    %372 = vmatprep.subr.mxu0 0.0
    %373 = vmatpush1.msra.mxu0 0.0
    %374 = vmatprep.subr.mxu0 0.0
    %375 = vmatpush1.msra.mxu0 0.0
    %376 = vmatprep.subr.mxu0 0.0
    %377 = vmatpush1.msra.mxu0 0.0
    %378 = vmatprep.subr.mxu0 0.0
    %379 = vmatpush1.msra.mxu0 0.0
    %380 = vmatprep.subr.mxu0 0.0
    %381 = vmatpush1.msra.mxu0 0.0
    %382 = vmatprep.subr.mxu0 0.0
    %383 = vmatpush1.msra.mxu0 0.0
    %384 = vmatprep.subr.mxu0 0.0
    %385 = vmatpush1.msra.mxu0 0.0
    %386 = vmatprep.subr.mxu0 0.0
    %387 = vmatpush1.msra.mxu0 0.0
    %388 = vmatprep.subr.mxu0 0.0
    %389 = vmatpush1.msra.mxu0 0.0
    %390 = vmatprep.subr.mxu0 0.0
    %391 = vmatpush1.msra.mxu0 0.0
    %392 = vmatprep.subr.mxu0 0.0
    %393 = vmatpush1.msra.mxu0 0.0
    %394 = vmatprep.subr.mxu0 0.0
    %395 = vmatpush1.msra.mxu0 0.0
    %396 = vmatprep.mubr.f32.mxu0 0.0
    %397 = vmatmul.mubr.f32.gmra.mrb[0].mxu0 %v330
    %v398 = vpop.f32.mrb[0].mxu0
    %v399 = vadd.f32 %v326, %v398
    %v400 = vpop.f32.mrb[0].mxu0
    %401 = vdwg.mxu0
    %vm402 = vcmp.gt.f32.partialorder %v399, 0.0
    %v403 = vmul.f32 %v399, 0.01
    %v404 = vsel %vm402, %v399, %v403
    %v405 = vld [vmem:[%s10] sm:$0xff]
    %v406 = vld [vmem:[%s10 + $0x8] sm:$0xff]
    %v407 = vld [vmem:[%s11] sm:$0x1]
    %v409 = vlaneseq
    %v410 = vshrl.u32 %v409, 7
    %v411 = vsub.s32 0, %v410
    %v412 = vrot.slane %v407, %v411
    %v415 = vsel %vm236, %v404, 0
    %417 = vmatprep.subr.mxu0 0.0
    %418 = vmatpush1.msra.mxu0 %v405
    %419 = vmatprep.subr.mxu0 0.0
    %420 = vmatpush1.msra.mxu0 %v406
    %421 = vmatprep.subr.mxu0 0.0
    %422 = vmatpush1.msra.mxu0 0.0
    %423 = vmatprep.subr.mxu0 0.0
    %424 = vmatpush1.msra.mxu0 0.0
    %425 = vmatprep.subr.mxu0 0.0
    %426 = vmatpush1.msra.mxu0 0.0
    %427 = vmatprep.subr.mxu0 0.0
    %428 = vmatpush1.msra.mxu0 0.0
    %429 = vmatprep.subr.mxu0 0.0
    %430 = vmatpush1.msra.mxu0 0.0
    %431 = vmatprep.subr.mxu0 0.0
    %432 = vmatpush1.msra.mxu0 0.0
    %433 = vmatprep.subr.mxu0 0.0
    %434 = vmatpush1.msra.mxu0 0.0
    %435 = vmatprep.subr.mxu0 0.0
    %436 = vmatpush1.msra.mxu0 0.0
    %437 = vmatprep.subr.mxu0 0.0
    %438 = vmatpush1.msra.mxu0 0.0
    %439 = vmatprep.subr.mxu0 0.0
    %440 = vmatpush1.msra.mxu0 0.0
    %441 = vmatprep.subr.mxu0 0.0
    %442 = vmatpush1.msra.mxu0 0.0
    %443 = vmatprep.subr.mxu0 0.0
    %444 = vmatpush1.msra.mxu0 0.0
    %445 = vmatprep.subr.mxu0 0.0
    %446 = vmatpush1.msra.mxu0 0.0
    %447 = vmatprep.subr.mxu0 0.0
    %448 = vmatpush1.msra.mxu0 0.0
    %449 = vmatprep.subr.mxu0 0.0
    %450 = vmatpush1.msra.mxu0 0.0
    %451 = vmatprep.subr.mxu0 0.0
    %452 = vmatpush1.msra.mxu0 0.0
    %453 = vmatprep.subr.mxu0 0.0
    %454 = vmatpush1.msra.mxu0 0.0
    %455 = vmatprep.subr.mxu0 0.0
    %456 = vmatpush1.msra.mxu0 0.0
    %457 = vmatprep.subr.mxu0 0.0
    %458 = vmatpush1.msra.mxu0 0.0
    %459 = vmatprep.subr.mxu0 0.0
    %460 = vmatpush1.msra.mxu0 0.0
    %461 = vmatprep.subr.mxu0 0.0
    %462 = vmatpush1.msra.mxu0 0.0
    %463 = vmatprep.subr.mxu0 0.0
    %464 = vmatpush1.msra.mxu0 0.0
    %465 = vmatprep.subr.mxu0 0.0
    %466 = vmatpush1.msra.mxu0 0.0
    %467 = vmatprep.subr.mxu0 0.0
    %468 = vmatpush1.msra.mxu0 0.0
    %469 = vmatprep.subr.mxu0 0.0
    %470 = vmatpush1.msra.mxu0 0.0
    %471 = vmatprep.subr.mxu0 0.0
    %472 = vmatpush1.msra.mxu0 0.0
    %473 = vmatprep.subr.mxu0 0.0
    %474 = vmatpush1.msra.mxu0 0.0
    %475 = vmatprep.subr.mxu0 0.0
    %476 = vmatpush1.msra.mxu0 0.0
    %477 = vmatprep.subr.mxu0 0.0
    %478 = vmatpush1.msra.mxu0 0.0
    %479 = vmatprep.subr.mxu0 0.0
    %480 = vmatpush1.msra.mxu0 0.0
    %481 = vmatprep.mubr.f32.mxu0 0.0
    %482 = vmatmul.mubr.f32.gmra.mrb[0].mxu0 %v415
    %v483 = vpop.f32.mrb[0].mxu0
    %v484 = vadd.f32 %v412, %v483
    %v485 = vpop.f32.mrb[0].mxu0
    %486 = vdwg.mxu0
    %vm487 = vcmp.gt.f32.partialorder %v484, 0.0
    %v488 = vmul.f32 %v484, 0.01
    %v489 = vsel %vm487, %v484, %v488
    %v490 = vld [vmem:[%s12] sm:$0xff]
    %v491 = vld [vmem:[%s12 + $0x8] sm:$0xff]
    %v492 = vld [vmem:[%s12 + $0x10] sm:$0xff]
    %v493 = vld [vmem:[%s13] sm:$0x1]
    %v495 = vlaneseq
    %v496 = vshrl.u32 %v495, 7
    %v497 = vsub.s32 0, %v496
    %v498 = vrot.slane %v493, %v497
    %v501 = vsel %vm150, %v489, 0
    %503 = vmatprep.subr.mxu0 0.0
    %504 = vmatpush1.msra.mxu0 %v490
    %505 = vmatprep.subr.mxu0 0.0
    %506 = vmatpush1.msra.mxu0 %v491
    %507 = vmatprep.subr.mxu0 0.0
    %508 = vmatpush1.msra.mxu0 %v492
    %509 = vmatprep.subr.mxu0 0.0
    %510 = vmatpush1.msra.mxu0 0.0
    %511 = vmatprep.subr.mxu0 0.0
    %512 = vmatpush1.msra.mxu0 0.0
    %513 = vmatprep.subr.mxu0 0.0
    %514 = vmatpush1.msra.mxu0 0.0
    %515 = vmatprep.subr.mxu0 0.0
    %516 = vmatpush1.msra.mxu0 0.0
    %517 = vmatprep.subr.mxu0 0.0
    %518 = vmatpush1.msra.mxu0 0.0
    %519 = vmatprep.subr.mxu0 0.0
    %520 = vmatpush1.msra.mxu0 0.0
    %521 = vmatprep.subr.mxu0 0.0
    %522 = vmatpush1.msra.mxu0 0.0
    %523 = vmatprep.subr.mxu0 0.0
    %524 = vmatpush1.msra.mxu0 0.0
    %525 = vmatprep.subr.mxu0 0.0
    %526 = vmatpush1.msra.mxu0 0.0
    %527 = vmatprep.subr.mxu0 0.0
    %528 = vmatpush1.msra.mxu0 0.0
    %529 = vmatprep.subr.mxu0 0.0
    %530 = vmatpush1.msra.mxu0 0.0
    %531 = vmatprep.subr.mxu0 0.0
    %532 = vmatpush1.msra.mxu0 0.0
    %533 = vmatprep.subr.mxu0 0.0
    %534 = vmatpush1.msra.mxu0 0.0
    %535 = vmatprep.subr.mxu0 0.0
    %536 = vmatpush1.msra.mxu0 0.0
    %537 = vmatprep.subr.mxu0 0.0
    %538 = vmatpush1.msra.mxu0 0.0
    %539 = vmatprep.subr.mxu0 0.0
    %540 = vmatpush1.msra.mxu0 0.0
    %541 = vmatprep.subr.mxu0 0.0
    %542 = vmatpush1.msra.mxu0 0.0
    %543 = vmatprep.subr.mxu0 0.0
    %544 = vmatpush1.msra.mxu0 0.0
    %545 = vmatprep.subr.mxu0 0.0
    %546 = vmatpush1.msra.mxu0 0.0
    %547 = vmatprep.subr.mxu0 0.0
    %548 = vmatpush1.msra.mxu0 0.0
    %549 = vmatprep.subr.mxu0 0.0
    %550 = vmatpush1.msra.mxu0 0.0
    %551 = vmatprep.subr.mxu0 0.0
    %552 = vmatpush1.msra.mxu0 0.0
    %553 = vmatprep.subr.mxu0 0.0
    %554 = vmatpush1.msra.mxu0 0.0
    %555 = vmatprep.subr.mxu0 0.0
    %556 = vmatpush1.msra.mxu0 0.0
    %557 = vmatprep.subr.mxu0 0.0
    %558 = vmatpush1.msra.mxu0 0.0
    %559 = vmatprep.subr.mxu0 0.0
    %560 = vmatpush1.msra.mxu0 0.0
    %561 = vmatprep.subr.mxu0 0.0
    %562 = vmatpush1.msra.mxu0 0.0
    %563 = vmatprep.subr.mxu0 0.0
    %564 = vmatpush1.msra.mxu0 0.0
    %565 = vmatprep.subr.mxu0 0.0
    %566 = vmatpush1.msra.mxu0 0.0
    %567 = vmatprep.mubr.f32.mxu0 0.0
    %568 = vmatmul.mubr.f32.gmra.mrb[0].mxu0 %v501
    %v569 = vpop.f32.mrb[0].mxu0
    %v570 = vadd.f32 %v498, %v569
    %v571 = vpop.f32.mrb[0].mxu0
    %572 = vdwg.mxu0
    %573 = vst.msk [vmem:[#allocation2] sm:$0xff] %vm63, %v570
    %574 = vst.msk [vmem:[#allocation4] sm:$0xff] %vm236, %v307
    // Predicated region
    $region58: #{tpu_custom_call.1} parent=1 // pred_check
      _
    $region59: #{tpu_custom_call.1} parent=1 // pred_check_branch
      %576 = sbr.rel (0) target = $region61
    $region60: #{tpu_custom_call.1} parent=1 // pred_region
      %s578 = ssub.s32 128, 128
      %579 = vsyncadd [#allocation3], %s578
      %s581 = sshll.u32 [#allocation2], 4
      %s582 = int_to_ptr.vmem [resolvable:$true] %s581
      %584 = dma.vmem_to_hbm [thread:$0]  %s582, 128, %s14, [#allocation3]
    $region61: #{tpu_custom_call.1} parent=1 // pred_fallthru
      _
    // Predicated region
    $region62: #{tpu_custom_call.1} parent=1 // pred_check
      _
    $region63: #{tpu_custom_call.1} parent=1 // pred_check_branch
      %586 = sbr.rel (0) target = $region65
    $region64: #{tpu_custom_call.1} parent=1 // pred_region
      %s588 = ssub.s32 128, 128
      %589 = vsyncadd [#allocation5], %s588
      %s591 = sshll.u32 [#allocation4], 4
      %s592 = int_to_ptr.vmem [resolvable:$true] %s591
      %594 = dma.vmem_to_hbm [thread:$0]  %s592, 128, %s15, [#allocation5]
    $region65: #{tpu_custom_call.1} parent=1 // pred_fallthru
      _
    // Predicated region
    $region66: #{tpu_custom_call.1} parent=1 // pred_check
      _
    $region67: #{tpu_custom_call.1} parent=1 // pred_check_branch
      %596 = sbr.rel (0) target = $region69
    $region68: #{tpu_custom_call.1} parent=1 // pred_region
      %597 = dma.done [#allocation3], 128
    $region69: #{tpu_custom_call.1} parent=1 // pred_fallthru
      _
    // Predicated region
    $region70: #{tpu_custom_call.1} parent=1 // pred_check
      _
    $region71: #{tpu_custom_call.1} parent=1 // pred_check_branch
      %599 = sbr.rel (0) target = $region73
    $region72: #{tpu_custom_call.1} parent=1 // pred_region
      %600 = dma.done [#allocation5], 128
    $region73: #{tpu_custom_call.1} parent=1 // pred_fallthru
      _
    %601 = vsyncpa [#allocation3], 1
    %602 = vsyncpa [#allocation5], 1

</llo_original>
